<compile_context>
chip_gen: v6e
topology: v6e:2x2x1
jax: 0.10.0
libtpu: 0.0.40
codegen_flags: <defaults>
</compile_context>

<pallas_src>
import functools

import jax
import jax.numpy as jnp
import numpy as np
from jax.experimental import pallas as pl
from jax.experimental.pallas import tpu as pltpu

BN_EPS = 1e-5                 # PyTorch BatchNorm1d default eps
LANE = 128                    # TPU lane width
APPROX_RECIPROCAL = True      # EUP-slot reciprocal for the softmax denominator
TILE_M = 1024                 # rows per grid step in the tiled (large-M) path
FUSED_MAX_M = 2048            # single-call fused path when batch*tokens <= this
NEG_INF = -1e30               # folded into padded-gate-column logits


def _round_up(x, m):
    return ((x + m - 1) // m) * m


def _vmem_limit_bytes():
    """Generation-aware scoped-VMEM budget (v7x: 64 MiB phys; v5e/v6e: 128)."""
    cap = 64 * 1024 * 1024
    try:
        cap = int(getattr(pltpu.get_tpu_info(), "vmem_capacity_bytes", cap))
    except Exception:
        pass
    return int(min(cap * 3 // 4, 100 * 1024 * 1024))


# ---------------------------------------------------------------------------
# Pass 1 (large-M path): per-tile accumulation of s = sum_m z[m, :]  (1, K)
# and the Gram matrix G = z^T z  (K, K).  Ragged tail rows of the last tile
# are masked to zero in-kernel; BN mean/var are derived in the wrapper via
#   mean = (s @ p0) / M,   E[sim^2] = diag(p0^T G p0) / M.
# ---------------------------------------------------------------------------
def _gram_stats_kernel(z_ref, s_ref, g_ref, *, tile_m, m_total, ragged):
    @pl.when(pl.program_id(0) == 0)
    def _():
        s_ref[...] = jnp.zeros_like(s_ref)
        g_ref[...] = jnp.zeros_like(g_ref)

    zt = z_ref[...]
    if ragged:
        rows = (jax.lax.broadcasted_iota(jnp.int32, zt.shape, 0)
                + pl.program_id(0) * tile_m)
        zt = jnp.where(rows < m_total, zt, 0.0)

    s_ref[...] += jnp.sum(zt, axis=0, keepdims=True)
    g_ref[...] += jax.lax.dot_general(                 # z^T z, f32 accumulation
        zt, zt, dimension_numbers=(((0,), (0,)), ((), ())),
        preferred_element_type=jnp.float32)


# ---------------------------------------------------------------------------
# Pass 2 (large-M path): fused gating + CP recombination for one M tile.
#   zw    = z @ [projs0 | factors1[:K]]     (single MXU pass over z)
#   sim   = zw[:, :n1p]                     gate logits
#   final = zw[:, n1p:] + b1                input-mode factor (bias folded)
#   xn    = sim * bn_scale + bn_shift       (padded gate cols carry -1e30)
#   e     = exp(xn - max);  f1 = (e @ factors0) / sum(e)   (deferred softmax)
#   out   = (f1 * final) @ factors2.T       written directly as (tile_m, O)
# ---------------------------------------------------------------------------
def _recombine_kernel(z_ref, wz_ref, scale_ref, shift_ref, b1_ref, f0_ref,
                      f2t_ref, out_ref, *, n1p):
    zw = jnp.dot(z_ref[...], wz_ref[...], preferred_element_type=jnp.float32)
    sim = zw[:, :n1p]                          # lane-aligned static slices
    final = zw[:, n1p:] + b1_ref[...]

    xn = sim * scale_ref[...] + shift_ref[...]
    xmax = jnp.max(xn, axis=-1, keepdims=True)
    e = jnp.exp(xn - xmax)
    denom = jnp.sum(e, axis=-1, keepdims=True)

    f1 = jnp.dot(e.astype(f0_ref.dtype), f0_ref[...],
                 preferred_element_type=jnp.float32)
    f1 = f1 * pl.reciprocal(denom, approx=APPROX_RECIPROCAL)

    prod = (f1 * final).astype(f2t_ref.dtype)
    out_ref[...] = jnp.dot(prod, f2t_ref[...],
                           preferred_element_type=jnp.float32)


# ---------------------------------------------------------------------------
# Fused single-call path (small/medium M): stats + gating + recombination in
# one kernel; all operands are whole-array VMEM refs (no grid).
# ---------------------------------------------------------------------------
def _fused_kernel(z_ref, wz_ref, kill_ref, b1_ref, f0_ref, f2t_ref, out_ref,
                  *, n1p, m_total):
    zw = jnp.dot(z_ref[...], wz_ref[...], preferred_element_type=jnp.float32)
    sim = zw[:, :n1p]
    final = zw[:, n1p:] + b1_ref[...]

    inv_m = jnp.float32(1.0 / m_total)
    mean = jnp.sum(sim, axis=0, keepdims=True) * inv_m
    var = jnp.maximum(jnp.sum(sim * sim, axis=0, keepdims=True) * inv_m
                      - mean * mean, 0.0)
    scale = jax.lax.rsqrt(var + BN_EPS)

    xn = (sim - mean) * scale + kill_ref[...]   # -1e30 on padded gate columns
    xmax = jnp.max(xn, axis=-1, keepdims=True)
    e = jnp.exp(xn - xmax)
    denom = jnp.sum(e, axis=-1, keepdims=True)

    f1 = jnp.dot(e.astype(f0_ref.dtype), f0_ref[...],
                 preferred_element_type=jnp.float32)
    f1 = f1 * pl.reciprocal(denom, approx=APPROX_RECIPROCAL)

    prod = (f1 * final).astype(f2t_ref.dtype)
    out_ref[...] = jnp.dot(prod, f2t_ref[...],
                           preferred_element_type=jnp.float32)


# ---------------------------------------------------------------------------
# One-time weight preprocessing (hoisted out of the per-call jit):
# pad gate / rank dims to lane multiples, fold the bias row, pack the two
# z-LHS weights into one operand, and cast MXU operands to matmul_dtype.
# ---------------------------------------------------------------------------
def pack_cpmmoe_params(p0, f0, f1, f2, matmul_dtype=jnp.bfloat16):
    """p0:(K,N1) f0:(N1,R) f1:(K+1,R) f2:(O,R)  ->  padded/packed param dict."""
    K, N1 = p0.shape
    R = f0.shape[1]
    O = f2.shape[0]
    n1p = _round_up(N1, LANE)
    rp = _round_up(R, LANE)
    f32 = jnp.float32

    p0p = jnp.zeros((K, n1p), f32).at[:, :N1].set(p0.astype(f32))
    w1p = jnp.zeros((K, rp), f32).at[:, :R].set(f1[:K].astype(f32))
    b1p = jnp.zeros((1, rp), f32).at[0, :R].set(f1[K].astype(f32))
    f0p = jnp.zeros((n1p, rp), f32).at[:N1, :R].set(f0.astype(f32))
    f2tp = jnp.zeros((rp, O), f32).at[:R, :].set(jnp.transpose(f2).astype(f32))
    col_kill = jnp.where(jnp.arange(n1p)[None, :] < N1, 0.0, NEG_INF).astype(f32)
    wz = jnp.concatenate([p0p, w1p], axis=1).astype(matmul_dtype)  # (K, n1p+rp)

    return {
        "p0_f32": p0p,                      # f32 copy for BN-stats wrapper math
        "wz": wz,                           # [projs0 | factors1[:K]]
        "col_kill": col_kill,               # (1, n1p) 0 / -1e30 padded-gate mask
        "b1": b1p,                          # (1, rp) bias row of factors[1]
        "f0": f0p.astype(matmul_dtype),     # (n1p, rp)
        "f2t": f2tp.astype(matmul_dtype),   # (rp, O)   factors[2].T
    }


@jax.jit
def cpmmoe_forward(z, params):
    """CPMMoE hierarchy=1 forward.  z: (B, T, K) or (B, K); params: packed."""
    if z.ndim == 2:
        z = z[:, None, :]
    B, T, K = z.shape
    M = B * T
    f32 = jnp.float32
    z2 = z.reshape(M, K)

    p0f = params["p0_f32"]
    wz = params["wz"]
    col_kill = params["col_kill"]
    b1 = params["b1"]
    f0 = params["f0"]
    f2t = params["f2t"]
    n1p = p0f.shape[1]
    rp = f0.shape[1]
    O = f2t.shape[1]
    mm_dtype = wz.dtype
    mm_bytes = np.dtype(mm_dtype).itemsize
    z_mm = z2.astype(mm_dtype)
    vmem_limit = _vmem_limit_bytes()

    weight_bytes = ((wz.size + f0.size + f2t.size) * mm_bytes
                    + (b1.size + 2 * n1p) * 4)
    gate_flops = (2 * M * K * (n1p + rp) + 2 * M * n1p * rp
                  + 2 * M * rp * O + 8 * M * n1p)

    if M <= FUSED_MAX_M:
        # ---- fused single-call path ----------------------------------------
        ce = pl.CostEstimate(
            flops=int(gate_flops + 6 * M * n1p),
            transcendentals=int(M * n1p),
            bytes_accessed=int(M * K * mm_bytes + M * O * 4 + weight_bytes))
        out2 = pl.pallas_call(
            functools.partial(_fused_kernel, n1p=n1p, m_total=M),
            out_shape=jax.ShapeDtypeStruct((M, O), f32),
            cost_estimate=ce,
            compiler_params=pltpu.CompilerParams(vmem_limit_bytes=vmem_limit),
        )(z_mm, wz, col_kill, b1, f0, f2t)
    else:
        # ---- large-M path: tiled stats pass + tiled recombination pass -----
        tile_m = TILE_M
        n_tiles = -(-M // tile_m)
        ragged = (M % tile_m) != 0
        z_f32 = z2.astype(f32)                  # stats stay f32 regardless of MXU dtype

        ce1 = pl.CostEstimate(
            flops=int(2 * M * K * K + M * K),
            transcendentals=0,
            bytes_accessed=int(M * K * 4 + (K * K + K) * 4))
        s, g = pl.pallas_call(
            functools.partial(_gram_stats_kernel, tile_m=tile_m,
                              m_total=M, ragged=ragged),
            out_shape=(jax.ShapeDtypeStruct((1, K), f32),
                       jax.ShapeDtypeStruct((K, K), f32)),
            grid=(n_tiles,),
            in_specs=[pl.BlockSpec((tile_m, K), lambda i: (i, 0))],
            out_specs=(pl.BlockSpec((1, K), lambda i: (0, 0)),
                       pl.BlockSpec((K, K), lambda i: (0, 0))),
            compiler_params=pltpu.CompilerParams(
                dimension_semantics=("arbitrary",),
                vmem_limit_bytes=vmem_limit),
            cost_estimate=ce1,
        )(z_f32)

        # BN affine terms (tiny (1, n1p) arrays; plain JAX glue).
        inv_m = jnp.float32(1.0 / M)
        mean = (s @ p0f) * inv_m                                   # (1, n1p)
        ex2 = jnp.sum((g @ p0f) * p0f, axis=0, keepdims=True) * inv_m
        var = jnp.maximum(ex2 - mean * mean, 0.0)
        scale = jax.lax.rsqrt(var + BN_EPS)
        shift = -mean * scale + col_kill        # kill padded gate columns

        ce2 = pl.CostEstimate(
            flops=int(gate_flops),
            transcendentals=int(M * n1p),
            bytes_accessed=int(M * K * mm_bytes + M * O * 4 + weight_bytes))
        out2 = pl.pallas_call(
            functools.partial(_recombine_kernel, n1p=n1p),
            out_shape=jax.ShapeDtypeStruct((M, O), f32),
            grid=(n_tiles,),
            in_specs=[
                pl.BlockSpec((tile_m, K), lambda i: (i, 0)),       # z tile
                pl.BlockSpec((K, n1p + rp), lambda i: (0, 0)),     # [projs0|fac1]
                pl.BlockSpec((1, n1p), lambda i: (0, 0)),          # bn scale
                pl.BlockSpec((1, n1p), lambda i: (0, 0)),          # bn shift
                pl.BlockSpec((1, rp), lambda i: (0, 0)),           # bias row
                pl.BlockSpec((n1p, rp), lambda i: (0, 0)),         # factors[0]
                pl.BlockSpec((rp, O), lambda i: (0, 0)),           # factors[2].T
            ],
            out_specs=pl.BlockSpec((tile_m, O), lambda i: (i, 0)),
            compiler_params=pltpu.CompilerParams(
                dimension_semantics=("parallel",),
                vmem_limit_bytes=vmem_limit),
            cost_estimate=ce2,
        )(z_mm, wz, scale, shift, b1, f0, f2t)

    out = out2.reshape(B, T, O)
    if T == 1:                                   # torch .squeeze(dim=1)
        out = out[:, 0, :]
    return out


def cpmmoe_reference(z, p0, f0, f1, f2):
    """Pure-JAX reference mirroring the PyTorch forward (hierarchy=1)."""
    if z.ndim == 2:
        z = z[:, None, :]
    sim = jnp.einsum('btk,kn->btn', z, p0)
    mean = jnp.mean(sim, axis=(0, 1), keepdims=True)
    var = jnp.mean(jnp.square(sim - mean), axis=(0, 1), keepdims=True)
    xn = (sim - mean) / jnp.sqrt(var + BN_EPS)
    a1 = jax.nn.softmax(xn, axis=-1)
    f1_act = jnp.einsum('btn,nr->btr', a1, f0)
    zb = jnp.concatenate([z, jnp.ones(z.shape[:2] + (1,), z.dtype)], axis=-1)
    final = jnp.einsum('bti,ir->btr', zb, f1)
    out = jnp.einsum('btr,btr,or->bto', f1_act, final, f2)
    if out.shape[1] == 1:
        out = out[:, 0, :]
    return out


def init_params(key, input_dim, output_dim, expert_dims, rank):
    """Deterministic parameter init following the module's __init__ shapes.

    Note: the module initializes projs[0] to zeros; small random values are
    used instead so the gating path is numerically non-trivial for this
    synthetic kernel test (shapes are identical).
    """
    assert len(expert_dims) == 1, "hierarchy=1 uses a single expert mode"
    n1 = expert_dims[0]
    k0, k1, k2, k3 = jax.random.split(key, 4)
    p0 = 0.5 * jax.random.normal(k0, (input_dim, n1), jnp.float32)
    f0 = jax.random.normal(k1, (n1, rank), jnp.float32) * 1.0 + 1.0
    f1 = jax.random.normal(k2, (input_dim + 1, rank), jnp.float32)
    f1 = f1 / jnp.linalg.norm(f1, axis=1, keepdims=True)   # F.normalize dim=1
    f2 = jax.random.normal(k3, (output_dim, rank), jnp.float32)
    f2 = f2 / jnp.linalg.norm(f2, axis=1, keepdims=True)
    return p0, f0, f1, f2


if __name__ == "__main__":
    INPUT_DIM, OUTPUT_DIM = 32, 16
    EXPERT_DIMS, RANK = [8], 8

    key = jax.random.PRNGKey(0)
    kz1, kz2, kz3, kp = jax.random.split(key, 4)
    p0, f0, f1, f2 = init_params(kp, INPUT_DIM, OUTPUT_DIM, EXPERT_DIMS, RANK)

    # Pack/pad/cast the weights once (hoisted out of the per-call jit).
    params_f32 = pack_cpmmoe_params(p0, f0, f1, f2, matmul_dtype=jnp.float32)
    params_bf16 = pack_cpmmoe_params(p0, f0, f1, f2)   # default: bf16 MXU operands

    # Approximate-reciprocal softmax denominator -> ~2^-12 per-row scale error;
    # exact 1e-5 parity is restored with APPROX_RECIPROCAL = False.
    tol = dict(rtol=5e-3, atol=5e-4)

    # case 1: small (batch, tokens, channels) input -> fused single-call path.
    z_a = jax.random.normal(kz1, (2, 8, INPUT_DIM), jnp.float32)
    out_a = jax.block_until_ready(cpmmoe_forward(z_a, params_f32))
    ref_a = cpmmoe_reference(z_a, p0, f0, f1, f2)
    np.testing.assert_allclose(np.asarray(out_a), np.asarray(ref_a), **tol)
    assert out_a.shape == (2, 8, OUTPUT_DIM)

    # case 2: 2-D (batch, channels) input -> token dim added then squeezed.
    z_b = jax.random.normal(kz2, (4, INPUT_DIM), jnp.float32)
    out_b = jax.block_until_ready(cpmmoe_forward(z_b, params_f32))
    ref_b = cpmmoe_reference(z_b, p0, f0, f1, f2)
    np.testing.assert_allclose(np.asarray(out_b), np.asarray(ref_b), **tol)
    assert out_b.shape == (4, OUTPUT_DIM)

    # case 3: M = 3*2731 = 8193 -> tiled two-pass path: ragged last tile,
    # cross-tile Gram-based BN statistics, megacore-parallel recombination.
    z_c = jax.random.normal(kz3, (3, 2731, INPUT_DIM), jnp.float32)
    out_c = jax.block_until_ready(cpmmoe_forward(z_c, params_f32))
    ref_c = cpmmoe_reference(z_c, p0, f0, f1, f2)
    np.testing.assert_allclose(np.asarray(out_c), np.asarray(ref_c), **tol)

    # case 4: default bf16 MXU operands (f32 accumulation) -> loose sanity check.
    out_d = jax.block_until_ready(cpmmoe_forward(z_a, params_bf16))
    np.testing.assert_allclose(np.asarray(out_d), np.asarray(ref_a),
                               rtol=1e-1, atol=1e-1)

    print("KERNEL_OK")
</pallas_src>

<mosaic_0001>
module attributes {stable_mosaic.version = 11 : i64} {
  func.func @_fused_kernel(%arg0: memref<16x32xf32, #tpu.memory_space<vmem>>, %arg1: memref<32x256xf32, #tpu.memory_space<vmem>>, %arg2: memref<1x128xf32, #tpu.memory_space<vmem>>, %arg3: memref<1x128xf32, #tpu.memory_space<vmem>>, %arg4: memref<128x128xf32, #tpu.memory_space<vmem>>, %arg5: memref<128x16xf32, #tpu.memory_space<vmem>>, %arg6: memref<16x16xf32, #tpu.memory_space<vmem>>) attributes {dimension_semantics = [], scalar_prefetch = 0 : i64, scratch_operands = 0 : i64, tpu.core_type = #tpu.core_type<tc>} {
    %c0 = arith.constant 0 : index
    %c0_0 = arith.constant 0 : index
    %0 = vector.load %arg0[%c0, %c0_0] : memref<16x32xf32, #tpu.memory_space<vmem>>, vector<16x32xf32>
    %c0_1 = arith.constant 0 : index
    %c0_2 = arith.constant 0 : index
    %1 = vector.load %arg1[%c0_1, %c0_2] : memref<32x256xf32, #tpu.memory_space<vmem>>, vector<32x256xf32>
    %cst = arith.constant dense<0.000000e+00> : vector<16x256xf32>
    %2 = tpu.matmul %0, %1, %cst {dimension_numbers = #tpu.dot_dimension_numbers<[1], [0], [0], [1], [0, 0, 1, 1], [], []>} : vector<16x32xf32>, vector<32x256xf32>, vector<16x256xf32> -> vector<16x256xf32>
    %3 = vector.extract_strided_slice %2 {offsets = [0, 0], sizes = [16, 128], strides = [1, 1]} : vector<16x256xf32> to vector<16x128xf32>
    %4 = vector.extract_strided_slice %2 {offsets = [0, 128], sizes = [16, 128], strides = [1, 1]} : vector<16x256xf32> to vector<16x128xf32>
    %c0_3 = arith.constant 0 : index
    %c0_4 = arith.constant 0 : index
    %5 = vector.load %arg3[%c0_3, %c0_4] : memref<1x128xf32, #tpu.memory_space<vmem>>, vector<1x128xf32>
    %6 = vector.broadcast %5 : vector<1x128xf32> to vector<16x128xf32>
    %7 = arith.addf %4, %6 : vector<16x128xf32>
    %cst_5 = arith.constant dense<0.000000e+00> : vector<128xf32>
    %8 = vector.multi_reduction <add>, %3, %cst_5 [0] : vector<16x128xf32> to vector<128xf32>
    %9 = vector.shape_cast %8 : vector<128xf32> to vector<1x128xf32>
    %cst_6 = arith.constant 6.250000e-02 : f32
    %10 = vector.broadcast %cst_6 : f32 to vector<1x128xf32>
    %11 = arith.mulf %9, %10 : vector<1x128xf32>
    %12 = arith.mulf %3, %3 : vector<16x128xf32>
    %cst_7 = arith.constant dense<0.000000e+00> : vector<128xf32>
    %13 = vector.multi_reduction <add>, %12, %cst_7 [0] : vector<16x128xf32> to vector<128xf32>
    %14 = vector.shape_cast %13 : vector<128xf32> to vector<1x128xf32>
    %cst_8 = arith.constant 6.250000e-02 : f32
    %15 = vector.broadcast %cst_8 : f32 to vector<1x128xf32>
    %16 = arith.mulf %14, %15 : vector<1x128xf32>
    %17 = arith.mulf %11, %11 : vector<1x128xf32>
    %18 = arith.subf %16, %17 : vector<1x128xf32>
    %cst_9 = arith.constant 0.000000e+00 : f32
    %19 = vector.broadcast %cst_9 : f32 to vector<1x128xf32>
    %20 = arith.maximumf %18, %19 : vector<1x128xf32>
    %cst_10 = arith.constant 9.99999974E-6 : f32
    %21 = vector.broadcast %cst_10 : f32 to vector<1x128xf32>
    %22 = arith.addf %20, %21 : vector<1x128xf32>
    %23 = math.rsqrt %22 : vector<1x128xf32>
    %24 = vector.broadcast %11 : vector<1x128xf32> to vector<16x128xf32>
    %25 = arith.subf %3, %24 : vector<16x128xf32>
    %26 = vector.broadcast %23 : vector<1x128xf32> to vector<16x128xf32>
    %27 = arith.mulf %25, %26 : vector<16x128xf32>
    %c0_11 = arith.constant 0 : index
    %c0_12 = arith.constant 0 : index
    %28 = vector.load %arg2[%c0_11, %c0_12] : memref<1x128xf32, #tpu.memory_space<vmem>>, vector<1x128xf32>
    %29 = vector.broadcast %28 : vector<1x128xf32> to vector<16x128xf32>
    %30 = arith.addf %27, %29 : vector<16x128xf32>
    %cst_13 = arith.constant dense<0xFF800000> : vector<16xf32>
    %31 = vector.multi_reduction <maximumf>, %30, %cst_13 [1] : vector<16x128xf32> to vector<16xf32>
    %32 = vector.shape_cast %31 : vector<16xf32> to vector<16x1xf32>
    %33 = vector.broadcast %32 : vector<16x1xf32> to vector<16x128xf32>
    %34 = arith.subf %30, %33 : vector<16x128xf32>
    %35 = math.exp %34 : vector<16x128xf32>
    %cst_14 = arith.constant dense<0.000000e+00> : vector<16xf32>
    %36 = vector.multi_reduction <add>, %35, %cst_14 [1] : vector<16x128xf32> to vector<16xf32>
    %37 = vector.shape_cast %36 : vector<16xf32> to vector<16x1xf32>
    %c0_15 = arith.constant 0 : index
    %c0_16 = arith.constant 0 : index
    %38 = vector.load %arg4[%c0_15, %c0_16] : memref<128x128xf32, #tpu.memory_space<vmem>>, vector<128x128xf32>
    %cst_17 = arith.constant dense<0.000000e+00> : vector<16x128xf32>
    %39 = tpu.matmul %35, %38, %cst_17 {dimension_numbers = #tpu.dot_dimension_numbers<[1], [0], [0], [1], [0, 0, 1, 1], [], []>} : vector<16x128xf32>, vector<128x128xf32>, vector<16x128xf32> -> vector<16x128xf32>
    %40 = tpu.reciprocal %37 {approx = true} : vector<16x1xf32> -> vector<16x1xf32>
    %41 = vector.broadcast %40 : vector<16x1xf32> to vector<16x128xf32>
    %42 = arith.mulf %39, %41 : vector<16x128xf32>
    %43 = arith.mulf %42, %7 : vector<16x128xf32>
    %c0_18 = arith.constant 0 : index
    %c0_19 = arith.constant 0 : index
    %44 = vector.load %arg5[%c0_18, %c0_19] : memref<128x16xf32, #tpu.memory_space<vmem>>, vector<128x16xf32>
    %cst_20 = arith.constant dense<0.000000e+00> : vector<16x16xf32>
    %45 = tpu.matmul %43, %44, %cst_20 {dimension_numbers = #tpu.dot_dimension_numbers<[1], [0], [0], [1], [0, 0, 1, 1], [], []>} : vector<16x128xf32>, vector<128x16xf32>, vector<16x16xf32> -> vector<16x16xf32>
    %c0_21 = arith.constant 0 : index
    %c0_22 = arith.constant 0 : index
    %46 = vector.load %arg6[%c0_21, %c0_22] : memref<16x16xf32, #tpu.memory_space<vmem>>, vector<16x16xf32>
    tpu.vector_store %arg6[%c0_21, %c0_22], %45 {strides = array<i32>} : memref<16x16xf32, #tpu.memory_space<vmem>>, vector<16x16xf32>,
    return
  }
}

</mosaic_0001>

<llo_original>
// kernel: cpmmoe_forward.1
$region0: #{cpmmoe_forward.1}
  #allocation0 [shape = 'u32[]', space=smem, size = 0x4, offset = 0x4, fixed_abs, tag = 'smem constant byte address 0x4 - core index']
  #allocation1 [shape = 'u32[144,128]{1,0:T(1,128)}', space=vmem, size = 0x12000, scoped, tag = 'internal scratch']
  %s0 = inlined_call_operand.vmem [shape: f32[16,32], index: 0, kind: input, shape index: {}]
  %s1 = inlined_call_operand.hbm [shape: f32[32,256], index: 1, kind: input, shape index: {}]
  %s2 = inlined_call_operand.vmem [shape: f32[1,128], index: 2, kind: input, shape index: {}]
  %s3 = inlined_call_operand.vmem [shape: f32[1,128], index: 3, kind: input, shape index: {}]
  %s4 = inlined_call_operand.vmem [shape: f32[128,128], index: 4, kind: input, shape index: {}]
  %s5 = inlined_call_operand.vmem [shape: f32[128,16], index: 5, kind: input, shape index: {}]
  %s6 = inlined_call_operand.hbm [shape: f32[16,16], index: 6, kind: output, shape index: {}]
  %s7 = sld [smem:[#allocation0]]
  $region38: #{cpmmoe_forward.1} parent=0
    _
  %s9 = ssub.s32 1, %s7
  %s10 = scalar_select 0, %s9, %s7
  $region1: #{cpmmoe_forward.1} parent=0
    #allocation2 [shape = 'u8[32768]{0}', space=vmem, size = 0x8000, scoped, tag = 'input window, operand 1, single buffered']
    #allocation3 [shape = 's32[1]{0}', space=sflag, size = 0x4, scoped, tag = 'scoped memory for cpmmoe_forward.1']
    #allocation4 [shape = 's32[1]{0}', space=sflag, size = 0x4, scoped, tag = 'scoped memory for cpmmoe_forward.1']
    #allocation5 [shape = 'u8[8192]{0}', space=vmem, size = 0x2000, scoped, tag = 'output window, operand 0, single buffered']
    %11 = vsyncpa [#allocation3], 0
    %12 = vsyncpa [#allocation4], 0
    // Predicated region
    $region2: #{cpmmoe_forward.1} parent=1 // pred_check
      _
    $region3: #{cpmmoe_forward.1} parent=1 // pred_check_branch
      %14 = sbr.rel (0) target = $region5
    $region4: #{cpmmoe_forward.1} parent=1 // pred_region
      _
    $region5: #{cpmmoe_forward.1} parent=1 // pred_fallthru
      _
    // Predicated region
    $region6: #{cpmmoe_forward.1} parent=1 // pred_check
      _
    $region7: #{cpmmoe_forward.1} parent=1 // pred_check_branch
      %16 = sbr.rel (0) target = $region9
    $region8: #{cpmmoe_forward.1} parent=1 // pred_region
      %s18 = ssub.s32 1024, 1024
      %19 = vsyncadd [#allocation3], %s18
      %s20 = sshll.u32 [#allocation2], 4
      %s21 = int_to_ptr.vmem [resolvable:$true] %s20
      %26 = dma.hbm_to_vmem [thread:$0]  %s1, 1024, %s21, [#allocation3], 256, 256, 16
    $region9: #{cpmmoe_forward.1} parent=1 // pred_fallthru
      _
    // Predicated region
    $region10: #{cpmmoe_forward.1} parent=1 // pred_check
      _
    $region11: #{cpmmoe_forward.1} parent=1 // pred_check_branch
      %28 = sbr.rel (0) target = $region13
    $region12: #{cpmmoe_forward.1} parent=1 // pred_region
      _
    $region13: #{cpmmoe_forward.1} parent=1 // pred_fallthru
      _
    // Predicated region
    $region14: #{cpmmoe_forward.1} parent=1 // pred_check
      _
    $region15: #{cpmmoe_forward.1} parent=1 // pred_check_branch
      %30 = sbr.rel (0) target = $region17
    $region16: #{cpmmoe_forward.1} parent=1 // pred_region
      _
    $region17: #{cpmmoe_forward.1} parent=1 // pred_fallthru
      _
    // Predicated region
    $region18: #{cpmmoe_forward.1} parent=1 // pred_check
      _
    $region19: #{cpmmoe_forward.1} parent=1 // pred_check_branch
      %32 = sbr.rel (0) target = $region21
    $region20: #{cpmmoe_forward.1} parent=1 // pred_region
      _
    $region21: #{cpmmoe_forward.1} parent=1 // pred_fallthru
      _
    // Predicated region
    $region22: #{cpmmoe_forward.1} parent=1 // pred_check
      _
    $region23: #{cpmmoe_forward.1} parent=1 // pred_check_branch
      %34 = sbr.rel (0) target = $region25
    $region24: #{cpmmoe_forward.1} parent=1 // pred_region
      _
    $region25: #{cpmmoe_forward.1} parent=1 // pred_fallthru
      _
    // Predicated region
    $region26: #{cpmmoe_forward.1} parent=1 // pred_check
      _
    $region27: #{cpmmoe_forward.1} parent=1 // pred_check_branch
      %36 = sbr.rel (0) target = $region29
    $region28: #{cpmmoe_forward.1} parent=1 // pred_region
      %37 = dma.done [#allocation3], 1024
    $region29: #{cpmmoe_forward.1} parent=1 // pred_fallthru
      _
    %v38 = vld [vmem:[%s0] sm:$0xff]
    %v39 = vld [vmem:[%s0 + $0x8] sm:$0xff]
    %v40 = vld [vmem:[#allocation2] sm:$0xff]
    %v41 = vld [vmem:[#allocation2 + $0x8] sm:$0xff]
    %v42 = vld [vmem:[#allocation2 + $0x10] sm:$0xff]
    %v43 = vld [vmem:[#allocation2 + $0x18] sm:$0xff]
    %v44 = vld [vmem:[#allocation2 + $0x20] sm:$0xff]
    %v45 = vld [vmem:[#allocation2 + $0x28] sm:$0xff]
    %v46 = vld [vmem:[#allocation2 + $0x30] sm:$0xff]
    %v47 = vld [vmem:[#allocation2 + $0x38] sm:$0xff]
    %vm48 = vcmask 261120
    %v50 = vsel %vm48, %v38, 0
    %v53 = vsel %vm48, %v39, 0
    %55 = vmatprep.subr.mxu0 0.0
    %56 = vmatpush1.msra.mxu0 0.0
    %57 = vmatprep.subr.mxu0 0.0
    %58 = vmatpush1.msra.mxu0 0.0
    %59 = vmatprep.subr.mxu0 0.0
    %60 = vmatpush1.msra.mxu0 0.0
    %61 = vmatprep.subr.mxu0 0.0
    %62 = vmatpush1.msra.mxu0 0.0
    %63 = vmatprep.subr.mxu0 0.0
    %64 = vmatpush1.msra.mxu0 0.0
    %65 = vmatprep.subr.mxu0 0.0
    %66 = vmatpush1.msra.mxu0 0.0
    %67 = vmatprep.subr.mxu0 0.0
    %68 = vmatpush1.msra.mxu0 0.0
    %69 = vmatprep.subr.mxu0 0.0
    %70 = vmatpush1.msra.mxu0 0.0
    %71 = vmatprep.subr.mxu0 0.0
    %72 = vmatpush1.msra.mxu0 0.0
    %73 = vmatprep.subr.mxu0 0.0
    %74 = vmatpush1.msra.mxu0 0.0
    %75 = vmatprep.subr.mxu0 0.0
    %76 = vmatpush1.msra.mxu0 0.0
    %77 = vmatprep.subr.mxu0 0.0
    %78 = vmatpush1.msra.mxu0 0.0
    %79 = vmatprep.subr.mxu0 %v47
    %80 = vmatpush1.msra.mxu0 %v46
    %81 = vmatprep.subr.mxu0 %v45
    %82 = vmatpush1.msra.mxu0 %v44
    %83 = vmatprep.subr.mxu0 %v43
    %84 = vmatpush1.msra.mxu0 %v42
    %85 = vmatprep.subr.mxu0 %v41
    %86 = vmatpush1.msra.mxu0 %v40
    %87 = vmatprep.subr.mxu0 0.0
    %88 = vmatpush2.msra.mxu0 0.0
    %89 = vmatprep.subr.mxu0 0.0
    %90 = vmatpush2.msra.mxu0 0.0
    %91 = vmatprep.subr.mxu0 0.0
    %92 = vmatpush2.msra.mxu0 0.0
    %93 = vmatprep.subr.mxu0 0.0
    %94 = vmatpush2.msra.mxu0 0.0
    %95 = vmatprep.subr.mxu0 0.0
    %96 = vmatpush2.msra.mxu0 0.0
    %97 = vmatprep.subr.mxu0 0.0
    %98 = vmatpush2.msra.mxu0 0.0
    %99 = vmatprep.subr.mxu0 0.0
    %100 = vmatpush2.msra.mxu0 0.0
    %101 = vmatprep.subr.mxu0 0.0
    %102 = vmatpush2.msra.mxu0 0.0
    %103 = vmatprep.subr.mxu0 0.0
    %104 = vmatpush2.msra.mxu0 0.0
    %105 = vmatprep.subr.mxu0 0.0
    %106 = vmatpush2.msra.mxu0 0.0
    %107 = vmatprep.subr.mxu0 0.0
    %108 = vmatpush2.msra.mxu0 0.0
    %109 = vmatprep.subr.mxu0 0.0
    %110 = vmatpush2.msra.mxu0 0.0
    %111 = vmatprep.subr.mxu0 0.0
    %112 = vmatpush2.msra.mxu0 0.0
    %113 = vmatprep.subr.mxu0 0.0
    %114 = vmatpush2.msra.mxu0 0.0
    %115 = vmatprep.subr.mxu0 0.0
    %116 = vmatpush2.msra.mxu0 0.0
    %117 = vmatprep.subr.mxu0 0.0
    %118 = vmatpush2.msra.mxu0 0.0
    %119 = vmatprep.mubr.f32.mxu0 0.0
    %120 = vmatmul.mubr.f32.gmra.mxu0 %v50
    %v121 = vpop.f32.mrf.mxu0
    %v122 = vadd.f32 0.0, %v121
    %v123 = vpop.f32.mrf.mxu0
    %v124 = vadd.f32 0.0, %v123
    %125 = vmatprep.mubr.f32.mxu0 0.0
    %126 = vmatmul.mubr.f32.gmra.mxu0 %v53
    %v127 = vpop.f32.mrf.mxu0
    %v128 = vadd.f32 0.0, %v127
    %v129 = vpop.f32.mrf.mxu0
    %v130 = vadd.f32 0.0, %v129
    %131 = vdwg.mxu0
    %v132 = vld [vmem:[%s3] sm:$0x1]
    %v134 = vlaneseq
    %v135 = vshrl.u32 %v134, 7
    %v136 = vsub.s32 0, %v135
    %v137 = vrot.slane %v132, %v136
    %v139 = vadd.f32 %v124, %v137
    %v140 = vadd.f32 %v130, %v137
    %v141 = vadd.f32 %v122, %v128
    %v142 = vrot.slane %v141, 4
    %v143 = vadd.f32 %v141, %v142
    %v144 = vrot.slane %v143, 2
    %v145 = vadd.f32 %v143, %v144
    %v146 = vrot.slane %v145, 1
    %v147 = vadd.f32 %v145, %v146
    %v148 = vmul.f32 %v147, 0.0625
    %v149 = vmul.f32 %v122, %v122
    %v150 = vmul.f32 %v128, %v128
    %v151 = vadd.f32 %v149, %v150
    %v152 = vrot.slane %v151, 4
    %v153 = vadd.f32 %v151, %v152
    %v154 = vrot.slane %v153, 2
    %v155 = vadd.f32 %v153, %v154
    %v156 = vrot.slane %v155, 1
    %v157 = vadd.f32 %v155, %v156
    %v158 = vmul.f32 %v157, 0.0625
    %v159 = vmul.f32 %v148, %v148
    %v160 = vsub.f32 %v158, %v159
    %v161 = vmax.f32 %v160, 0.0
    %v162 = vadd.f32 %v161, 1e-05
    %v163 = vrsqrt.pop %v162
    %v164 = vsub.f32 %v122, %v148
    %v165 = vsub.f32 %v128, %v148
    %v166 = vmul.f32 %v164, %v163
    %v167 = vmul.f32 %v165, %v163
    %v168 = vld [vmem:[%s2] sm:$0x1]
    %v170 = vlaneseq
    %v171 = vshrl.u32 %v170, 7
    %v172 = vsub.s32 0, %v171
    %v173 = vrot.slane %v168, %v172
    %v175 = vadd.f32 %v166, %v173
    %v176 = vadd.f32 %v167, %v173
    %177 = vmax.xlane.f32.xlu0 %v175
    %v178 = vpop.xlane.xlu0 %177
    %179 = vmax.xlane.f32.xlu0 %v176
    %v180 = vpop.xlane.xlu0 %179
    %v181 = vsub.f32 %v175, %v178
    %v182 = vsub.f32 %v176, %v180
    %v183 = vmul.f32 %v181, 1.442695
    %v184 = vpow.pop %v183
    %v185 = vmul.f32 %v182, 1.442695
    %v186 = vpow.pop %v185
    %187 = vadd.xlane.f32.xlu0 %v184
    %v188 = vpop.xlane.xlu0 %187
    %189 = vadd.xlane.f32.xlu0 %v186
    %v190 = vpop.xlane.xlu0 %189
    %v191 = vld [vmem:[%s4] sm:$0xff]
    %v192 = vld [vmem:[%s4 + $0x8] sm:$0xff]
    %v193 = vld [vmem:[%s4 + $0x10] sm:$0xff]
    %v194 = vld [vmem:[%s4 + $0x18] sm:$0xff]
    %v195 = vld [vmem:[%s4 + $0x20] sm:$0xff]
    %v196 = vld [vmem:[%s4 + $0x28] sm:$0xff]
    %v197 = vld [vmem:[%s4 + $0x30] sm:$0xff]
    %v198 = vld [vmem:[%s4 + $0x38] sm:$0xff]
    %v199 = vld [vmem:[%s4 + $0x40] sm:$0xff]
    %v200 = vld [vmem:[%s4 + $0x48] sm:$0xff]
    %v201 = vld [vmem:[%s4 + $0x50] sm:$0xff]
    %v202 = vld [vmem:[%s4 + $0x58] sm:$0xff]
    %v203 = vld [vmem:[%s4 + $0x60] sm:$0xff]
    %v204 = vld [vmem:[%s4 + $0x68] sm:$0xff]
    %v205 = vld [vmem:[%s4 + $0x70] sm:$0xff]
    %v206 = vld [vmem:[%s4 + $0x78] sm:$0xff]
    %207 = vmatprep.subr.mxu0 0.0
    %208 = vmatpush1.msra.mxu0 %v206
    %209 = vmatprep.subr.mxu0 0.0
    %210 = vmatpush1.msra.mxu0 %v205
    %211 = vmatprep.subr.mxu0 0.0
    %212 = vmatpush1.msra.mxu0 %v204
    %213 = vmatprep.subr.mxu0 0.0
    %214 = vmatpush1.msra.mxu0 %v203
    %215 = vmatprep.subr.mxu0 0.0
    %216 = vmatpush1.msra.mxu0 %v202
    %217 = vmatprep.subr.mxu0 0.0
    %218 = vmatpush1.msra.mxu0 %v201
    %219 = vmatprep.subr.mxu0 0.0
    %220 = vmatpush1.msra.mxu0 %v200
    %221 = vmatprep.subr.mxu0 0.0
    %222 = vmatpush1.msra.mxu0 %v199
    %223 = vmatprep.subr.mxu0 0.0
    %224 = vmatpush1.msra.mxu0 %v198
    %225 = vmatprep.subr.mxu0 0.0
    %226 = vmatpush1.msra.mxu0 %v197
    %227 = vmatprep.subr.mxu0 0.0
    %228 = vmatpush1.msra.mxu0 %v196
    %229 = vmatprep.subr.mxu0 0.0
    %230 = vmatpush1.msra.mxu0 %v195
    %231 = vmatprep.subr.mxu0 0.0
    %232 = vmatpush1.msra.mxu0 %v194
    %233 = vmatprep.subr.mxu0 0.0
    %234 = vmatpush1.msra.mxu0 %v193
    %235 = vmatprep.subr.mxu0 0.0
    %236 = vmatpush1.msra.mxu0 %v192
    %237 = vmatprep.subr.mxu0 0.0
    %238 = vmatpush1.msra.mxu0 %v191
    %239 = vmatprep.subr.mxu0 0.0
    %240 = vmatpush2.msra.mxu0 0.0
    %241 = vmatprep.subr.mxu0 0.0
    %242 = vmatpush2.msra.mxu0 0.0
    %243 = vmatprep.subr.mxu0 0.0
    %244 = vmatpush2.msra.mxu0 0.0
    %245 = vmatprep.subr.mxu0 0.0
    %246 = vmatpush2.msra.mxu0 0.0
    %247 = vmatprep.subr.mxu0 0.0
    %248 = vmatpush2.msra.mxu0 0.0
    %249 = vmatprep.subr.mxu0 0.0
    %250 = vmatpush2.msra.mxu0 0.0
    %251 = vmatprep.subr.mxu0 0.0
    %252 = vmatpush2.msra.mxu0 0.0
    %253 = vmatprep.subr.mxu0 0.0
    %254 = vmatpush2.msra.mxu0 0.0
    %255 = vmatprep.subr.mxu0 0.0
    %256 = vmatpush2.msra.mxu0 0.0
    %257 = vmatprep.subr.mxu0 0.0
    %258 = vmatpush2.msra.mxu0 0.0
    %259 = vmatprep.subr.mxu0 0.0
    %260 = vmatpush2.msra.mxu0 0.0
    %261 = vmatprep.subr.mxu0 0.0
    %262 = vmatpush2.msra.mxu0 0.0
    %263 = vmatprep.subr.mxu0 0.0
    %264 = vmatpush2.msra.mxu0 0.0
    %265 = vmatprep.subr.mxu0 0.0
    %266 = vmatpush2.msra.mxu0 0.0
    %267 = vmatprep.subr.mxu0 0.0
    %268 = vmatpush2.msra.mxu0 0.0
    %269 = vmatprep.subr.mxu0 0.0
    %270 = vmatpush2.msra.mxu0 0.0
    %271 = vmatprep.mubr.f32.mxu0 0.0
    %272 = vmatmul.mubr.f32.gmra.mxu0 %v184
    %v273 = vpop.f32.mrf.mxu0
    %v274 = vadd.f32 0.0, %v273
    %v275 = vpop.f32.mrf.mxu0
    %276 = vmatprep.mubr.f32.mxu0 0.0
    %277 = vmatmul.mubr.f32.gmra.mxu0 %v186
    %v278 = vpop.f32.mrf.mxu0
    %v279 = vadd.f32 0.0, %v278
    %v280 = vpop.f32.mrf.mxu0
    %281 = vdwg.mxu0
    %v282 = vrcp.pop %v188
    %v283 = vrcp.pop %v190
    %v284 = vmul.f32 %v274, %v282
    %v285 = vmul.f32 %v279, %v283
    %v286 = vmul.f32 %v284, %v139
    %v287 = vmul.f32 %v285, %v140
    %v288 = vld [vmem:[%s5] sm:$0xff]
    %v289 = vld [vmem:[%s5 + $0x8] sm:$0xff]
    %v290 = vld [vmem:[%s5 + $0x10] sm:$0xff]
    %v291 = vld [vmem:[%s5 + $0x18] sm:$0xff]
    %v292 = vld [vmem:[%s5 + $0x20] sm:$0xff]
    %v293 = vld [vmem:[%s5 + $0x28] sm:$0xff]
    %v294 = vld [vmem:[%s5 + $0x30] sm:$0xff]
    %v295 = vld [vmem:[%s5 + $0x38] sm:$0xff]
    %v296 = vld [vmem:[%s5 + $0x40] sm:$0xff]
    %v297 = vld [vmem:[%s5 + $0x48] sm:$0xff]
    %v298 = vld [vmem:[%s5 + $0x50] sm:$0xff]
    %v299 = vld [vmem:[%s5 + $0x58] sm:$0xff]
    %v300 = vld [vmem:[%s5 + $0x60] sm:$0xff]
    %v301 = vld [vmem:[%s5 + $0x68] sm:$0xff]
    %v302 = vld [vmem:[%s5 + $0x70] sm:$0xff]
    %v303 = vld [vmem:[%s5 + $0x78] sm:$0xff]
    %304 = vmatprep.subr.mxu0 0.0
    %305 = vmatpush1.msra.mxu0 %v303
    %306 = vmatprep.subr.mxu0 0.0
    %307 = vmatpush1.msra.mxu0 %v302
    %308 = vmatprep.subr.mxu0 0.0
    %309 = vmatpush1.msra.mxu0 %v301
    %310 = vmatprep.subr.mxu0 0.0
    %311 = vmatpush1.msra.mxu0 %v300
    %312 = vmatprep.subr.mxu0 0.0
    %313 = vmatpush1.msra.mxu0 %v299
    %314 = vmatprep.subr.mxu0 0.0
    %315 = vmatpush1.msra.mxu0 %v298
    %316 = vmatprep.subr.mxu0 0.0
    %317 = vmatpush1.msra.mxu0 %v297
    %318 = vmatprep.subr.mxu0 0.0
    %319 = vmatpush1.msra.mxu0 %v296
    %320 = vmatprep.subr.mxu0 0.0
    %321 = vmatpush1.msra.mxu0 %v295
    %322 = vmatprep.subr.mxu0 0.0
    %323 = vmatpush1.msra.mxu0 %v294
    %324 = vmatprep.subr.mxu0 0.0
    %325 = vmatpush1.msra.mxu0 %v293
    %326 = vmatprep.subr.mxu0 0.0
    %327 = vmatpush1.msra.mxu0 %v292
    %328 = vmatprep.subr.mxu0 0.0
    %329 = vmatpush1.msra.mxu0 %v291
    %330 = vmatprep.subr.mxu0 0.0
    %331 = vmatpush1.msra.mxu0 %v290
    %332 = vmatprep.subr.mxu0 0.0
    %333 = vmatpush1.msra.mxu0 %v289
    %334 = vmatprep.subr.mxu0 0.0
    %335 = vmatpush1.msra.mxu0 %v288
    %336 = vmatprep.subr.mxu0 0.0
    %337 = vmatpush2.msra.mxu0 0.0
    %338 = vmatprep.subr.mxu0 0.0
    %339 = vmatpush2.msra.mxu0 0.0
    %340 = vmatprep.subr.mxu0 0.0
    %341 = vmatpush2.msra.mxu0 0.0
    %342 = vmatprep.subr.mxu0 0.0
    %343 = vmatpush2.msra.mxu0 0.0
    %344 = vmatprep.subr.mxu0 0.0
    %345 = vmatpush2.msra.mxu0 0.0
    %346 = vmatprep.subr.mxu0 0.0
    %347 = vmatpush2.msra.mxu0 0.0
    %348 = vmatprep.subr.mxu0 0.0
    %349 = vmatpush2.msra.mxu0 0.0
    %350 = vmatprep.subr.mxu0 0.0
    %351 = vmatpush2.msra.mxu0 0.0
    %352 = vmatprep.subr.mxu0 0.0
    %353 = vmatpush2.msra.mxu0 0.0
    %354 = vmatprep.subr.mxu0 0.0
    %355 = vmatpush2.msra.mxu0 0.0
    %356 = vmatprep.subr.mxu0 0.0
    %357 = vmatpush2.msra.mxu0 0.0
    %358 = vmatprep.subr.mxu0 0.0
    %359 = vmatpush2.msra.mxu0 0.0
    %360 = vmatprep.subr.mxu0 0.0
    %361 = vmatpush2.msra.mxu0 0.0
    %362 = vmatprep.subr.mxu0 0.0
    %363 = vmatpush2.msra.mxu0 0.0
    %364 = vmatprep.subr.mxu0 0.0
    %365 = vmatpush2.msra.mxu0 0.0
    %366 = vmatprep.subr.mxu0 0.0
    %367 = vmatpush2.msra.mxu0 0.0
    %368 = vmatprep.mubr.f32.mxu0 0.0
    %369 = vmatmul.mubr.f32.gmra.mxu0 %v286
    %v370 = vpop.f32.mrf.mxu0
    %v371 = vadd.f32 0.0, %v370
    %v372 = vpop.f32.mrf.mxu0
    %373 = vmatprep.mubr.f32.mxu0 0.0
    %374 = vmatmul.mubr.f32.gmra.mxu0 %v287
    %v375 = vpop.f32.mrf.mxu0
    %v376 = vadd.f32 0.0, %v375
    %v377 = vpop.f32.mrf.mxu0
    %378 = vdwg.mxu0
    %vm379 = vcmask 130048
    %380 = vst.msk [vmem:[#allocation5] sm:$0xff] %vm379, %v371
    %381 = vst.msk [vmem:[#allocation5 + $0x8] sm:$0xff] %vm379, %v376
    // Predicated region
    $region30: #{cpmmoe_forward.1} parent=1 // pred_check
      _
    $region31: #{cpmmoe_forward.1} parent=1 // pred_check_branch
      %383 = sbr.rel (0) target = $region33
    $region32: #{cpmmoe_forward.1} parent=1 // pred_region
      %s385 = ssub.s32 256, 256
      %386 = vsyncadd [#allocation4], %s385
      %s387 = sshll.u32 [#allocation5], 4
      %s388 = int_to_ptr.vmem [resolvable:$true] %s387
      %393 = dma.vmem_to_hbm [thread:$0]  %s388, 256, %s6, [#allocation4], 128, 128, 8
    $region33: #{cpmmoe_forward.1} parent=1 // pred_fallthru
      _
    // Predicated region
    $region34: #{cpmmoe_forward.1} parent=1 // pred_check
      _
    $region35: #{cpmmoe_forward.1} parent=1 // pred_check_branch
      %395 = sbr.rel (0) target = $region37
    $region36: #{cpmmoe_forward.1} parent=1 // pred_region
      %396 = dma.done [#allocation4], 256
    $region37: #{cpmmoe_forward.1} parent=1 // pred_fallthru
      _
    %397 = vsyncpa [#allocation3], 1
    %398 = vsyncpa [#allocation4], 1

</llo_original>
